<compile_context>
chip_gen: v7x
topology: tpu7x:2x2x1
jax: 0.10.0
libtpu: 0.0.40
codegen_flags: <defaults>
</compile_context>

<pallas_src>
import functools

import jax
import jax.numpy as jnp
from jax.experimental import pallas as pl
from jax.experimental.pallas import tpu as pltpu


def _rmsnorm_kernel(x_ref, w_ref, o_ref, *, eps: float, d_model: int):
    # Compute in float32 exactly like the reference (x.to(torch.float32)).
    x = x_ref[...].astype(jnp.float32)            # (tile, d_model)
    w = w_ref[...].astype(jnp.float32)            # (1, d_model)
    sum_sq = jnp.sum(x * x, axis=-1, keepdims=True)           # (tile, 1)
    inv_rms = jax.lax.rsqrt(sum_sq * (1.0 / d_model) + eps)   # EUP rsqrt
    o_ref[...] = (x * inv_rms * w).astype(o_ref.dtype)


def _cdiv(a: int, b: int) -> int:
    return -(-a // b)


def _round_down(a: int, b: int) -> int:
    return (a // b) * b


def _tpu_params():
    """Best-effort (vmem_capacity_bytes, num_tensorcores); safe fallbacks."""
    vmem_cap = 64 << 20   # most conservative physical VMEM (v7x) if query fails
    num_cores = 1
    try:
        info = pltpu.get_tpu_info()
        cap = getattr(info, "vmem_capacity_bytes", None)
        if cap:
            vmem_cap = int(cap)
        for attr in ("num_cores", "num_tensorcores", "tensorcores_per_chip",
                     "num_cores_per_chip", "core_count"):
            v = getattr(info, attr, None)
            if isinstance(v, int) and v > 0:
                num_cores = v
                break
    except Exception:
        pass
    return vmem_cap, num_cores


def rmsnorm(x: jax.Array, weight: jax.Array, eps: float = 1e-5,
            _max_tile: int | None = None) -> jax.Array:
    """Applies RMSNorm along the last axis of x (same shape/dtype out)."""
    orig_shape = x.shape
    orig_dtype = x.dtype
    d_model = orig_shape[-1]
    assert weight.shape == (d_model,)

    x2d = x.reshape(-1, d_model)
    rows = x2d.shape[0]
    itemsize = jnp.dtype(orig_dtype).itemsize

    # Sublane pack: 8 rows for 4-byte, 16 for 2-byte, 32 for 1-byte dtypes.
    sublane = max(8, 32 // itemsize)

    # --- generation-aware VMEM budget ---------------------------------------
    vmem_cap, num_cores = _tpu_params()
    # Keep headroom under the physical ceiling for Mosaic internal scratch.
    vmem_limit = max(32 << 20, min(vmem_cap - (8 << 20), 96 << 20))
    vmem_budget = (vmem_limit * 3) // 4

    # Per-row VMEM footprint: double-buffered input + output blocks plus ~2
    # live f32 temporaries per element while computing in float32.
    bytes_per_row = d_model * (4 * itemsize + 8)
    tile = max(sublane, _round_down(vmem_budget // bytes_per_row, sublane))
    # ~8 MiB input-block cap: beyond that DMA time already dwarfs the ~0.35 us
    # per-grid-step overhead (diminishing returns, longer pipeline fill).
    cap = max(sublane, _round_down((8 << 20) // (d_model * itemsize), sublane))
    tile = min(tile, cap)
    if _max_tile is not None:
        tile = max(sublane, min(tile, _round_down(_max_tile, sublane)))

    # Multi-TensorCore chips (v7x): keep >= 2 grid steps per core so the
    # "parallel" axis shards and the double-buffer has something to overlap.
    # Single-TC chips (v5e/v6e): never shrink the tile for a megacore that
    # doesn't exist.
    if num_cores > 1 and rows >= 2 * num_cores * sublane:
        per_core_cap = max(sublane,
                           _round_down(rows // (2 * num_cores), sublane))
        tile = min(tile, per_core_cap)

    if tile >= rows:
        # One block covers everything; a full-extent block dim is exempt from
        # the sublane-divisibility rule.
        tile = rows

    grid = _cdiv(rows, tile)

    w2d = weight.reshape(1, d_model)
    kernel = functools.partial(_rmsnorm_kernel, eps=eps, d_model=d_model)

    cost = pl.CostEstimate(
        flops=4 * rows * d_model,
        transcendentals=rows,
        bytes_accessed=2 * rows * d_model * itemsize
        + d_model * jnp.dtype(weight.dtype).itemsize,
    )

    out2d = pl.pallas_call(
        kernel,
        out_shape=jax.ShapeDtypeStruct((rows, d_model), orig_dtype),
        grid_spec=pltpu.PrefetchScalarGridSpec(
            num_scalar_prefetch=0,
            grid=(grid,),
            in_specs=[
                pl.BlockSpec((tile, d_model), lambda i: (i, 0)),
                pl.BlockSpec((1, d_model), lambda i: (0, 0)),  # weight resident
            ],
            out_specs=pl.BlockSpec((tile, d_model), lambda i: (i, 0)),
        ),
        compiler_params=pltpu.CompilerParams(
            dimension_semantics=("parallel",),
            vmem_limit_bytes=vmem_limit,
        ),
        cost_estimate=cost,
    )(x2d, w2d)

    return out2d.reshape(orig_shape)


def rmsnorm_ref(x, weight, eps=1e-5):
    in_dtype = x.dtype
    xf = x.astype(jnp.float32)
    rms = jnp.sqrt(jnp.mean(xf * xf, axis=-1, keepdims=True) + eps)
    return ((xf / rms) * weight.astype(jnp.float32)).astype(in_dtype)


if __name__ == "__main__":
    eps = 1e-5
    key = jax.random.PRNGKey(0)

    # Primary test: shapes implied by the module (batch, seq, d_model).
    batch, seq, d_model = 2, 8, 32
    x = jax.random.normal(key, (batch, seq, d_model), dtype=jnp.float32)
    weight = jnp.ones((d_model,), dtype=jnp.float32)  # reset_parameters -> ones

    out = jax.block_until_ready(rmsnorm(x, weight, eps=eps))
    ref = rmsnorm_ref(x, weight, eps=eps)
    assert out.shape == x.shape and out.dtype == x.dtype
    assert jnp.allclose(out, ref, atol=1e-5, rtol=1e-5)

    # Ragged-grid test: force a small tile so the masked partial last block
    # (rows % tile != 0) path is exercised — no pad / slice copies involved.
    key2 = jax.random.PRNGKey(1)
    x2 = jax.random.normal(key2, (2, 9, d_model), dtype=jnp.float32)  # 18 rows
    w2 = jax.random.normal(jax.random.PRNGKey(2), (d_model,), dtype=jnp.float32)
    out2 = jax.block_until_ready(rmsnorm(x2, w2, eps=eps, _max_tile=8))
    ref2 = rmsnorm_ref(x2, w2, eps=eps)
    assert jnp.allclose(out2, ref2, atol=1e-5, rtol=1e-5)

    print("KERNEL_OK")
</pallas_src>

<mosaic_0001>
module attributes {stable_mosaic.version = 11 : i64} {
  func.func @_rmsnorm_kernel(%arg0: i32, %arg1: memref<16x32xf32, #tpu.memory_space<vmem>>, %arg2: memref<1x32xf32, #tpu.memory_space<vmem>>, %arg3: memref<16x32xf32, #tpu.memory_space<vmem>>) attributes {dimension_semantics = [#tpu.dimension_semantics<parallel>], iteration_bounds = array<i64: 1>, scalar_prefetch = 0 : i64, scratch_operands = 0 : i64, tpu.core_type = #tpu.core_type<tc>, window_params = [{transform_indices = @transform_0, window_bounds = array<i64: 16, 32>}, {pipeline_mode = #tpu.pipeline_mode<synchronous>, transform_indices = @transform_1, window_bounds = array<i64: 1, 32>}, {transform_indices = @transform_2, window_bounds = array<i64: 16, 32>}]} {
    %c0 = arith.constant 0 : index
    %c0_0 = arith.constant 0 : index
    %0 = vector.load %arg1[%c0, %c0_0] : memref<16x32xf32, #tpu.memory_space<vmem>>, vector<16x32xf32>
    %c0_1 = arith.constant 0 : index
    %c0_2 = arith.constant 0 : index
    %1 = vector.load %arg2[%c0_1, %c0_2] : memref<1x32xf32, #tpu.memory_space<vmem>>, vector<1x32xf32>
    %2 = arith.mulf %0, %0 : vector<16x32xf32>
    %cst = arith.constant dense<0.000000e+00> : vector<16xf32>
    %3 = vector.multi_reduction <add>, %2, %cst [1] : vector<16x32xf32> to vector<16xf32>
    %4 = vector.shape_cast %3 : vector<16xf32> to vector<16x1xf32>
    %cst_3 = arith.constant 3.125000e-02 : f32
    %5 = vector.broadcast %cst_3 : f32 to vector<16x1xf32>
    %6 = arith.mulf %4, %5 : vector<16x1xf32>
    %cst_4 = arith.constant 9.99999974E-6 : f32
    %7 = vector.broadcast %cst_4 : f32 to vector<16x1xf32>
    %8 = arith.addf %6, %7 : vector<16x1xf32>
    %9 = math.rsqrt %8 : vector<16x1xf32>
    %10 = vector.broadcast %9 : vector<16x1xf32> to vector<16x32xf32>
    %11 = arith.mulf %0, %10 : vector<16x32xf32>
    %12 = vector.broadcast %1 : vector<1x32xf32> to vector<16x32xf32>
    %13 = arith.mulf %11, %12 : vector<16x32xf32>
    %c0_5 = arith.constant 0 : index
    %c0_6 = arith.constant 0 : index
    %14 = vector.load %arg3[%c0_5, %c0_6] : memref<16x32xf32, #tpu.memory_space<vmem>>, vector<16x32xf32>
    tpu.vector_store %arg3[%c0_5, %c0_6], %13 {strides = array<i32>} : memref<16x32xf32, #tpu.memory_space<vmem>>, vector<16x32xf32>,
    return
  }
  func.func @transform_0(%arg0: i32) -> (i32, i32) {
    %c0_i32 = arith.constant 0 : i32
    %c0_i32_0 = arith.constant 0 : i32
    return %arg0, %c0_i32 : i32, i32
  }
  func.func @transform_1(%arg0: i32) -> (i32, i32) {
    %c0_i32 = arith.constant 0 : i32
    %c0_i32_0 = arith.constant 0 : i32
    %c0_i32_1 = arith.constant 0 : i32
    return %c0_i32, %c0_i32_0 : i32, i32
  }
  func.func @transform_2(%arg0: i32) -> (i32, i32) {
    %c0_i32 = arith.constant 0 : i32
    %c0_i32_0 = arith.constant 0 : i32
    return %arg0, %c0_i32 : i32, i32
  }
}

</mosaic_0001>

<llo_original>
// kernel: tpu_custom_call.1
$region0: #{tpu_custom_call.1}
  #allocation0 [shape = 'u32[]', space=smem, size = 0x4, offset = 0x4, fixed_abs, tag = 'smem constant byte address 0x4 - core index']
  #allocation1 [shape = 'u32[144,128]{1,0:T(1,128)}', space=vmem, size = 0x12000, scoped, tag = 'internal scratch']
  %s0 = inlined_call_operand.hbm [shape: f32[16,32], index: 0, kind: input, shape index: {}]
  %s1 = inlined_call_operand.vmem [shape: f32[1,32], index: 1, kind: input, shape index: {}]
  %s2 = inlined_call_operand.hbm [shape: f32[16,32], index: 2, kind: output, shape index: {}]
  %s3 = sld [smem:[#allocation0]]
  $region22: #{tpu_custom_call.1} parent=0
    _
  %s5 = ssub.s32 1, %s3
  %s6 = scalar_select 0, %s5, %s3
  $region1: #{tpu_custom_call.1} parent=0
    #allocation2 [shape = 'u8[8192]{0}', space=vmem, size = 0x2000, scoped, tag = 'input window, operand 0, single buffered']
    #allocation3 [shape = 's32[1]{0}', space=sflag, size = 0x4, scoped, tag = 'scoped memory for tpu_custom_call.1']
    #allocation4 [shape = 's32[1]{0}', space=sflag, size = 0x4, scoped, tag = 'scoped memory for tpu_custom_call.1']
    #allocation5 [shape = 'u8[8192]{0}', space=vmem, size = 0x2000, scoped, tag = 'output window, operand 0, single buffered']
    %7 = vsyncpa [#allocation3], 0
    %8 = vsyncpa [#allocation4], 0
    // Predicated region
    $region2: #{tpu_custom_call.1} parent=1 // pred_check
      _
    $region3: #{tpu_custom_call.1} parent=1 // pred_check_branch
      %10 = sbr.rel (0) target = $region5
    $region4: #{tpu_custom_call.1} parent=1 // pred_region
      %s12 = ssub.s32 256, 256
      %13 = vsyncadd [#allocation3], %s12
      %s14 = sshll.u32 [#allocation2], 4
      %s15 = int_to_ptr.vmem [resolvable:$true] %s14
      %20 = dma.hbm_to_vmem [thread:$0]  %s0, 256, %s15, [#allocation3], 128, 128, 8
    $region5: #{tpu_custom_call.1} parent=1 // pred_fallthru
      _
    // Predicated region
    $region6: #{tpu_custom_call.1} parent=1 // pred_check
      _
    $region7: #{tpu_custom_call.1} parent=1 // pred_check_branch
      %22 = sbr.rel (0) target = $region9
    $region8: #{tpu_custom_call.1} parent=1 // pred_region
      _
    $region9: #{tpu_custom_call.1} parent=1 // pred_fallthru
      _
    // Predicated region
    $region10: #{tpu_custom_call.1} parent=1 // pred_check
      _
    $region11: #{tpu_custom_call.1} parent=1 // pred_check_branch
      %24 = sbr.rel (0) target = $region13
    $region12: #{tpu_custom_call.1} parent=1 // pred_region
      %25 = dma.done [#allocation3], 256
    $region13: #{tpu_custom_call.1} parent=1 // pred_fallthru
      _
    %v26 = vld [vmem:[#allocation2] sm:$0xff]
    %v27 = vld [vmem:[#allocation2 + $0x8] sm:$0xff]
    %v28 = vld [vmem:[%s1] sm:$0x1]
    %v29 = vmul.f32 %v26, %v26
    %v30 = vmul.f32 %v27, %v27
    %vm31 = vcmask 261120
    %v32 = vsel %vm31, %v29, 0.0
    %33 = vadd.xlane.f32.xlu0 %v32
    %v34 = vpop.xlane.xlu0 %33
    %v35 = vsel %vm31, %v30, 0.0
    %36 = vadd.xlane.f32.xlu0 %v35
    %v37 = vpop.xlane.xlu0 %36
    %v38 = vmul.f32 %v34, 0.03125
    %v39 = vmul.f32 %v37, 0.03125
    %v40 = vadd.f32 %v38, 1e-05
    %v41 = vadd.f32 %v39, 1e-05
    %v42 = vrsqrt.pop %v40
    %v43 = vrsqrt.pop %v41
    %v44 = vmul.f32 %v26, %v42
    %v45 = vmul.f32 %v27, %v43
    %v47 = vlaneseq
    %v48 = vshrl.u32 %v47, 7
    %v49 = vsub.s32 0, %v48
    %v50 = vrot.slane %v28, %v49
    %v52 = vmul.f32 %v44, %v50
    %v53 = vmul.f32 %v45, %v50
    %54 = vst.msk [vmem:[#allocation5] sm:$0xff] %vm31, %v52
    %55 = vst.msk [vmem:[#allocation5 + $0x8] sm:$0xff] %vm31, %v53
    // Predicated region
    $region14: #{tpu_custom_call.1} parent=1 // pred_check
      _
    $region15: #{tpu_custom_call.1} parent=1 // pred_check_branch
      %57 = sbr.rel (0) target = $region17
    $region16: #{tpu_custom_call.1} parent=1 // pred_region
      %s59 = ssub.s32 256, 256
      %60 = vsyncadd [#allocation4], %s59
      %s61 = sshll.u32 [#allocation5], 4
      %s62 = int_to_ptr.vmem [resolvable:$true] %s61
      %67 = dma.vmem_to_hbm [thread:$0]  %s62, 256, %s2, [#allocation4], 128, 128, 8
    $region17: #{tpu_custom_call.1} parent=1 // pred_fallthru
      _
    // Predicated region
    $region18: #{tpu_custom_call.1} parent=1 // pred_check
      _
    $region19: #{tpu_custom_call.1} parent=1 // pred_check_branch
      %69 = sbr.rel (0) target = $region21
    $region20: #{tpu_custom_call.1} parent=1 // pred_region
      %70 = dma.done [#allocation4], 256
    $region21: #{tpu_custom_call.1} parent=1 // pred_fallthru
      _
    %71 = vsyncpa [#allocation3], 1
    %72 = vsyncpa [#allocation4], 1

</llo_original>
